<compile_context>
chip_gen: v7x
topology: tpu7x:2x2x1
jax: 0.10.0
libtpu: 0.0.40
codegen_flags: <defaults>
</compile_context>

<pallas_src>
import jax
import jax.numpy as jnp
import numpy as np
from jax.experimental import pallas as pl
from jax.experimental.pallas import tpu as pltpu


def _round_up(n, m):
    return ((n + m - 1) // m) * m


def cnn_kernel(x_ref, a_ref, b1_ref, w2_ref, b2_ref, out_ref):
    """x:(16,Bt) a:(256,16) b1:(64,1) w2:(6,64) b2:(6,1) out:(6,Bt)."""
    # Conv2d(1,16,k=3,p=1) over the full 4x4 grid as one dense matmul.
    h = jnp.dot(a_ref[...], x_ref[...], preferred_element_type=jnp.float32)   # (256, Bt)
    # MaxPool2d(2): max over the 4 window offsets = 4 contiguous 64-row blocks.
    m = jnp.maximum(jnp.maximum(h[0:64, :], h[64:128, :]),
                    jnp.maximum(h[128:192, :], h[192:256, :]))                # (64, Bt)
    # Conv bias + ReLU folded after the pool (exact: max/add/relu are monotone).
    pooled = jnp.maximum(m + b1_ref[...], 0.0)                                # (64, Bt)
    # Linear(64 -> 6) as a single fused K=64 matmul; lane-dense output store.
    out_ref[...] = (jnp.dot(w2_ref[...], pooled, preferred_element_type=jnp.float32)
                    + b2_ref[...])


def _conv_as_dense_matrix(w1):
    """A (256,16): row = w*64 + p*16 + c, col = input pixel si*4 + sj."""
    di = np.arange(2).reshape(2, 1, 1, 1, 1, 1, 1)
    dj = np.arange(2).reshape(1, 2, 1, 1, 1, 1, 1)
    pi = np.arange(2).reshape(1, 1, 2, 1, 1, 1, 1)
    pj = np.arange(2).reshape(1, 1, 1, 2, 1, 1, 1)
    ch = np.arange(16).reshape(1, 1, 1, 1, 16, 1, 1)
    si = np.arange(4).reshape(1, 1, 1, 1, 1, 4, 1)
    sj = np.arange(4).reshape(1, 1, 1, 1, 1, 1, 4)
    # conv output position (i,j) = (2*pi+di, 2*pj+dj); tap index for pixel (si,sj)
    ki = si - (2 * pi + di) + 1
    kj = sj - (2 * pj + dj) + 1
    valid = (ki >= 0) & (ki < 3) & (kj >= 0) & (kj < 3)
    shape = (2, 2, 2, 2, 16, 4, 4)
    ch_b = np.broadcast_to(ch, shape)
    ki_b = np.broadcast_to(np.clip(ki, 0, 2), shape)
    kj_b = np.broadcast_to(np.clip(kj, 0, 2), shape)
    valid_b = jnp.asarray(np.broadcast_to(valid, shape))
    a = jnp.where(valid_b, w1[ch_b, 0, ki_b, kj_b], 0.0)
    return a.reshape(256, 16).astype(jnp.float32)


@jax.jit
def cnn_forward(x, w1, b1, w2, b2):
    """x: (B, 4, 4). Returns (B, 6) float32 matching the PyTorch CNN.forward."""
    B = x.shape[0]
    # Lane-dense batch tile (multiple of 128), capped so VMEM per grid step is
    # a few MiB: safe on v5e (16 MiB) / v6e (32 MiB) / v7x (64 MiB) scoped VMEM.
    bt = min(2048, _round_up(B, 128))
    bp = _round_up(B, bt)

    # --- glue: put batch on the lane axis, zero-pad to the tile multiple -----
    x_t = x.astype(jnp.float32).reshape(B, 16).T           # (16, B), row = si*4+sj
    x_t = jnp.pad(x_t, ((0, 0), (0, bp - B)))              # (16, Bp)

    # --- glue: fold weights into kernel layouts (tiny, weights-only work) ----
    a = _conv_as_dense_matrix(w1)                          # (256, 16)
    b1r = jnp.tile(b1.astype(jnp.float32), 4).reshape(64, 1)            # row = p*16+c
    w2k = jnp.transpose(w2.astype(jnp.float32).reshape(6, 16, 4),
                        (0, 2, 1)).reshape(6, 64)          # col = p*16+c
    b2r = b2.astype(jnp.float32).reshape(6, 1)

    out = pl.pallas_call(
        cnn_kernel,
        out_shape=jax.ShapeDtypeStruct((6, bp), jnp.float32),
        grid=(bp // bt,),
        in_specs=[
            pl.BlockSpec((16, bt), lambda i: (0, i)),      # x tile, batch on lanes
            pl.BlockSpec((256, 16), lambda i: (0, 0)),     # conv-as-matmul weight
            pl.BlockSpec((64, 1), lambda i: (0, 0)),       # conv bias (pool order)
            pl.BlockSpec((6, 64), lambda i: (0, 0)),       # linear weight (reordered)
            pl.BlockSpec((6, 1), lambda i: (0, 0)),        # linear bias
        ],
        out_specs=pl.BlockSpec((6, bt), lambda i: (0, i)),
        compiler_params=pltpu.CompilerParams(
            dimension_semantics=("parallel",),
            vmem_limit_bytes=32 * 1024 * 1024,
        ),
    )(x_t, a, b1r, w2k, b2r)
    return out[:, :B].T


def cnn_reference(x, w1, b1, w2, b2):
    """Pure-JAX reference mirroring the PyTorch forward (NCHW)."""
    xf = x.astype(jnp.float32)[:, None, :, :]
    y = jax.lax.conv_general_dilated(
        xf, w1, window_strides=(1, 1), padding=((1, 1), (1, 1)),
        dimension_numbers=("NCHW", "OIHW", "NCHW"))
    y = jnp.maximum(y + b1[None, :, None, None], 0.0)
    y = jax.lax.reduce_window(y, -jnp.inf, jax.lax.max,
                              (1, 1, 2, 2), (1, 1, 2, 2), "VALID")
    flat = y.reshape(y.shape[0], -1)
    return flat @ w2.T + b2


if __name__ == "__main__":
    key = jax.random.PRNGKey(0)
    k1, k2, k3, k4, kx = jax.random.split(key, 5)

    # Deterministic synthetic parameters (shapes from CNN.__init__)
    w1 = jax.random.normal(k1, (16, 1, 3, 3), jnp.float32) * 0.1   # conv1 weight
    b1 = jax.random.normal(k2, (16,), jnp.float32) * 0.1            # conv1 bias
    w2 = jax.random.normal(k3, (6, 64), jnp.float32) * 0.1          # output weight
    b2 = jax.random.normal(k4, (6,), jnp.float32) * 0.1             # output bias

    # Input: forward implies 4x4 spatial (Linear expects 16*2*2 = 64 features)
    x = jax.random.normal(kx, (2, 4, 4), jnp.float32)

    out = jax.block_until_ready(cnn_forward(x, w1, b1, w2, b2))
    ref = jax.block_until_ready(cnn_reference(x, w1, b1, w2, b2))
    assert out.shape == (2, 6)
    assert np.allclose(np.asarray(out), np.asarray(ref), rtol=1e-4, atol=1e-4)
    print("KERNEL_OK")
</pallas_src>

<mosaic_0001>
module attributes {stable_mosaic.version = 11 : i64} {
  func.func @cnn_kernel(%arg0: i32, %arg1: memref<16x128xf32, #tpu.memory_space<vmem>>, %arg2: memref<256x16xf32, #tpu.memory_space<vmem>>, %arg3: memref<64x1xf32, #tpu.memory_space<vmem>>, %arg4: memref<6x64xf32, #tpu.memory_space<vmem>>, %arg5: memref<6x1xf32, #tpu.memory_space<vmem>>, %arg6: memref<6x128xf32, #tpu.memory_space<vmem>>) attributes {dimension_semantics = [#tpu.dimension_semantics<parallel>], iteration_bounds = array<i64: 1>, scalar_prefetch = 0 : i64, scratch_operands = 0 : i64, tpu.core_type = #tpu.core_type<tc>, window_params = [{transform_indices = @transform_0, window_bounds = array<i64: 16, 128>}, {pipeline_mode = #tpu.pipeline_mode<synchronous>, transform_indices = @transform_1, window_bounds = array<i64: 256, 16>}, {pipeline_mode = #tpu.pipeline_mode<synchronous>, transform_indices = @transform_2, window_bounds = array<i64: 64, 1>}, {pipeline_mode = #tpu.pipeline_mode<synchronous>, transform_indices = @transform_3, window_bounds = array<i64: 6, 64>}, {pipeline_mode = #tpu.pipeline_mode<synchronous>, transform_indices = @transform_4, window_bounds = array<i64: 6, 1>}, {transform_indices = @transform_5, window_bounds = array<i64: 6, 128>}]} {
    %c0 = arith.constant 0 : index
    %c0_0 = arith.constant 0 : index
    %0 = vector.load %arg2[%c0, %c0_0] : memref<256x16xf32, #tpu.memory_space<vmem>>, vector<256x16xf32>
    %c0_1 = arith.constant 0 : index
    %c0_2 = arith.constant 0 : index
    %1 = vector.load %arg1[%c0_1, %c0_2] : memref<16x128xf32, #tpu.memory_space<vmem>>, vector<16x128xf32>
    %cst = arith.constant dense<0.000000e+00> : vector<256x128xf32>
    %2 = tpu.matmul %0, %1, %cst {dimension_numbers = #tpu.dot_dimension_numbers<[1], [0], [0], [1], [0, 0, 1, 1], [], []>} : vector<256x16xf32>, vector<16x128xf32>, vector<256x128xf32> -> vector<256x128xf32>
    %3 = vector.extract_strided_slice %2 {offsets = [0, 0], sizes = [64, 128], strides = [1, 1]} : vector<256x128xf32> to vector<64x128xf32>
    %4 = vector.extract_strided_slice %2 {offsets = [64, 0], sizes = [64, 128], strides = [1, 1]} : vector<256x128xf32> to vector<64x128xf32>
    %5 = arith.maximumf %3, %4 : vector<64x128xf32>
    %6 = vector.extract_strided_slice %2 {offsets = [128, 0], sizes = [64, 128], strides = [1, 1]} : vector<256x128xf32> to vector<64x128xf32>
    %7 = vector.extract_strided_slice %2 {offsets = [192, 0], sizes = [64, 128], strides = [1, 1]} : vector<256x128xf32> to vector<64x128xf32>
    %8 = arith.maximumf %6, %7 : vector<64x128xf32>
    %9 = arith.maximumf %5, %8 : vector<64x128xf32>
    %c0_3 = arith.constant 0 : index
    %c0_4 = arith.constant 0 : index
    %10 = vector.load %arg3[%c0_3, %c0_4] : memref<64x1xf32, #tpu.memory_space<vmem>>, vector<64x1xf32>
    %11 = vector.broadcast %10 : vector<64x1xf32> to vector<64x128xf32>
    %12 = arith.addf %9, %11 : vector<64x128xf32>
    %cst_5 = arith.constant 0.000000e+00 : f32
    %13 = vector.broadcast %cst_5 : f32 to vector<64x128xf32>
    %14 = arith.maximumf %12, %13 : vector<64x128xf32>
    %c0_6 = arith.constant 0 : index
    %c0_7 = arith.constant 0 : index
    %15 = vector.load %arg4[%c0_6, %c0_7] : memref<6x64xf32, #tpu.memory_space<vmem>>, vector<6x64xf32>
    %cst_8 = arith.constant dense<0.000000e+00> : vector<6x128xf32>
    %16 = tpu.matmul %15, %14, %cst_8 {dimension_numbers = #tpu.dot_dimension_numbers<[1], [0], [0], [1], [0, 0, 1, 1], [], []>} : vector<6x64xf32>, vector<64x128xf32>, vector<6x128xf32> -> vector<6x128xf32>
    %c0_9 = arith.constant 0 : index
    %c0_10 = arith.constant 0 : index
    %17 = vector.load %arg5[%c0_9, %c0_10] : memref<6x1xf32, #tpu.memory_space<vmem>>, vector<6x1xf32>
    %18 = vector.broadcast %17 : vector<6x1xf32> to vector<6x128xf32>
    %19 = arith.addf %16, %18 : vector<6x128xf32>
    %c0_11 = arith.constant 0 : index
    %c0_12 = arith.constant 0 : index
    %20 = vector.load %arg6[%c0_11, %c0_12] : memref<6x128xf32, #tpu.memory_space<vmem>>, vector<6x128xf32>
    tpu.vector_store %arg6[%c0_11, %c0_12], %19 {strides = array<i32>} : memref<6x128xf32, #tpu.memory_space<vmem>>, vector<6x128xf32>,
    return
  }
  func.func @transform_0(%arg0: i32) -> (i32, i32) {
    %c0_i32 = arith.constant 0 : i32
    %c0_i32_0 = arith.constant 0 : i32
    return %c0_i32, %arg0 : i32, i32
  }
  func.func @transform_1(%arg0: i32) -> (i32, i32) {
    %c0_i32 = arith.constant 0 : i32
    %c0_i32_0 = arith.constant 0 : i32
    %c0_i32_1 = arith.constant 0 : i32
    return %c0_i32, %c0_i32_0 : i32, i32
  }
  func.func @transform_2(%arg0: i32) -> (i32, i32) {
    %c0_i32 = arith.constant 0 : i32
    %c0_i32_0 = arith.constant 0 : i32
    %c0_i32_1 = arith.constant 0 : i32
    return %c0_i32, %c0_i32_0 : i32, i32
  }
  func.func @transform_3(%arg0: i32) -> (i32, i32) {
    %c0_i32 = arith.constant 0 : i32
    %c0_i32_0 = arith.constant 0 : i32
    %c0_i32_1 = arith.constant 0 : i32
    return %c0_i32, %c0_i32_0 : i32, i32
  }
  func.func @transform_4(%arg0: i32) -> (i32, i32) {
    %c0_i32 = arith.constant 0 : i32
    %c0_i32_0 = arith.constant 0 : i32
    %c0_i32_1 = arith.constant 0 : i32
    return %c0_i32, %c0_i32_0 : i32, i32
  }
  func.func @transform_5(%arg0: i32) -> (i32, i32) {
    %c0_i32 = arith.constant 0 : i32
    %c0_i32_0 = arith.constant 0 : i32
    return %c0_i32, %arg0 : i32, i32
  }
}

</mosaic_0001>

<llo_original>
// kernel: tile.8
$region0: #{tile.8}
  #allocation0 [shape = 's32[1]{0}', space=sflag, size = 0x4, scoped, tag = 'scoped memory for tile.8']
  %s0 = inlined_call_operand.vmem [shape: f32[16], index: 0, kind: input, shape index: {}]
  %s1 = inlined_call_operand.vmem [shape: f32[4,16], index: 1, kind: output, shape index: {}]
  // Predicated region
  $region2: #{tile.8} parent=0 // pred_check
    _
  $region3: #{tile.8} parent=0 // pred_check_branch
    %3 = sbr.rel (0) target = $region5
  $region4: #{tile.8} parent=0 // pred_region
    _
  $region5: #{tile.8} parent=0 // pred_fallthru
    _
  %v4 = vld [vmem:[%s0] ss:$0 sm:$0xff]
  %5 = vst [vmem:[%s1] sm:$0xf] %v4

// kernel: tile.0
$region0: #{tile.0}
  %s0 = inlined_call_operand.vmem [shape: f32[4,16], index: 0, kind: input, shape index: {}]
  %s1 = inlined_call_operand.vmem [shape: f32[64,1], index: 1, kind: output, shape index: {}]
  $region1: #{tile.0} parent=0
    #allocation0 [shape = 'u8[4096]{0}', space=vmem, size = 0x1000, scoped, tag = 'scoped mem for input reshape']
    %s3 = sshllo.u32 0, 4
    %v4 = vld [vmem:[%s0] sm:%s3]
    %5 = vst [vmem:[#allocation0] sm:%s3] %v4
    %v6 = vld [vmem:[#allocation0] sm:$0xf]
    %vm7 = vcmask 7168
    %8 = vst.msk [vmem:[%s1] ss:$16 sm:$0x3] %vm7, %v6
    %9 = vst.msk [vmem:[%s1] ss:$16 sm:$0xc] %vm7, %v6
    %v10 = vld [vmem:[#allocation0] sm:$0xf]
    %11 = vrot.lane.b32.xlu0 %v10, 127
    %v12 = vpop.permute.xlu0 %11
    %vm13 = vcmask 7168
    %s14 = scalar_lea.vmem %s1, 1
    %15 = vst.msk [vmem:[%s14] ss:$16 sm:$0x3] %vm13, %v12
    %s16 = scalar_lea.vmem %s1, 1
    %17 = vst.msk [vmem:[%s16] ss:$16 sm:$0xc] %vm13, %v12
    %v18 = vld [vmem:[#allocation0] sm:$0xf]
    %19 = vrot.lane.b32.xlu0 %v18, 126
    %v20 = vpop.permute.xlu0 %19
    %vm21 = vcmask 7168
    %s22 = scalar_lea.vmem %s1, 2
    %23 = vst.msk [vmem:[%s22] ss:$16 sm:$0x3] %vm21, %v20
    %s24 = scalar_lea.vmem %s1, 2
    %25 = vst.msk [vmem:[%s24] ss:$16 sm:$0xc] %vm21, %v20
    %v26 = vld [vmem:[#allocation0] sm:$0xf]
    %27 = vrot.lane.b32.xlu0 %v26, 125
    %v28 = vpop.permute.xlu0 %27
    %vm29 = vcmask 7168
    %s30 = scalar_lea.vmem %s1, 3
    %31 = vst.msk [vmem:[%s30] ss:$16 sm:$0x3] %vm29, %v28
    %s32 = scalar_lea.vmem %s1, 3
    %33 = vst.msk [vmem:[%s32] ss:$16 sm:$0xc] %vm29, %v28
    %v34 = vld [vmem:[#allocation0] sm:$0xf]
    %35 = vrot.lane.b32.xlu0 %v34, 124
    %v36 = vpop.permute.xlu0 %35
    %vm37 = vcmask 7168
    %s38 = scalar_lea.vmem %s1, 4
    %39 = vst.msk [vmem:[%s38] ss:$16 sm:$0x3] %vm37, %v36
    %s40 = scalar_lea.vmem %s1, 4
    %41 = vst.msk [vmem:[%s40] ss:$16 sm:$0xc] %vm37, %v36
    %v42 = vld [vmem:[#allocation0] sm:$0xf]
    %43 = vrot.lane.b32.xlu0 %v42, 123
    %v44 = vpop.permute.xlu0 %43
    %vm45 = vcmask 7168
    %s46 = scalar_lea.vmem %s1, 5
    %47 = vst.msk [vmem:[%s46] ss:$16 sm:$0x3] %vm45, %v44
    %s48 = scalar_lea.vmem %s1, 5
    %49 = vst.msk [vmem:[%s48] ss:$16 sm:$0xc] %vm45, %v44
    %v50 = vld [vmem:[#allocation0] sm:$0xf]
    %51 = vrot.lane.b32.xlu0 %v50, 122
    %v52 = vpop.permute.xlu0 %51
    %vm53 = vcmask 7168
    %s54 = scalar_lea.vmem %s1, 6
    %55 = vst.msk [vmem:[%s54] ss:$16 sm:$0x3] %vm53, %v52
    %s56 = scalar_lea.vmem %s1, 6
    %57 = vst.msk [vmem:[%s56] ss:$16 sm:$0xc] %vm53, %v52
    %v58 = vld [vmem:[#allocation0] sm:$0xf]
    %59 = vrot.lane.b32.xlu0 %v58, 121
    %v60 = vpop.permute.xlu0 %59
    %vm61 = vcmask 7168
    %s62 = scalar_lea.vmem %s1, 7
    %63 = vst.msk [vmem:[%s62] ss:$16 sm:$0x3] %vm61, %v60
    %s64 = scalar_lea.vmem %s1, 7
    %65 = vst.msk [vmem:[%s64] ss:$16 sm:$0xc] %vm61, %v60
    %v66 = vld [vmem:[#allocation0] sm:$0xf]
    %67 = vrot.lane.b32.xlu0 %v66, 120
    %v68 = vpop.permute.xlu0 %67
    %vm69 = vcmask 7168
    %s70 = scalar_lea.vmem %s1, 8
    %71 = vst.msk [vmem:[%s70] ss:$16 sm:$0x3] %vm69, %v68
    %s72 = scalar_lea.vmem %s1, 8
    %73 = vst.msk [vmem:[%s72] ss:$16 sm:$0xc] %vm69, %v68
    %v74 = vld [vmem:[#allocation0] sm:$0xf]
    %75 = vrot.lane.b32.xlu0 %v74, 119
    %v76 = vpop.permute.xlu0 %75
    %vm77 = vcmask 7168
    %s78 = scalar_lea.vmem %s1, 9
    %79 = vst.msk [vmem:[%s78] ss:$16 sm:$0x3] %vm77, %v76
    %s80 = scalar_lea.vmem %s1, 9
    %81 = vst.msk [vmem:[%s80] ss:$16 sm:$0xc] %vm77, %v76
    %v82 = vld [vmem:[#allocation0] sm:$0xf]
    %83 = vrot.lane.b32.xlu0 %v82, 118
    %v84 = vpop.permute.xlu0 %83
    %vm85 = vcmask 7168
    %s86 = scalar_lea.vmem %s1, 10
    %87 = vst.msk [vmem:[%s86] ss:$16 sm:$0x3] %vm85, %v84
    %s88 = scalar_lea.vmem %s1, 10
    %89 = vst.msk [vmem:[%s88] ss:$16 sm:$0xc] %vm85, %v84
    %v90 = vld [vmem:[#allocation0] sm:$0xf]
    %91 = vrot.lane.b32.xlu0 %v90, 117
    %v92 = vpop.permute.xlu0 %91
    %vm93 = vcmask 7168
    %s94 = scalar_lea.vmem %s1, 11
    %95 = vst.msk [vmem:[%s94] ss:$16 sm:$0x3] %vm93, %v92
    %s96 = scalar_lea.vmem %s1, 11
    %97 = vst.msk [vmem:[%s96] ss:$16 sm:$0xc] %vm93, %v92
    %v98 = vld [vmem:[#allocation0] sm:$0xf]
    %99 = vrot.lane.b32.xlu0 %v98, 116
    %v100 = vpop.permute.xlu0 %99
    %vm101 = vcmask 7168
    %s102 = scalar_lea.vmem %s1, 12
    %103 = vst.msk [vmem:[%s102] ss:$16 sm:$0x3] %vm101, %v100
    %s104 = scalar_lea.vmem %s1, 12
    %105 = vst.msk [vmem:[%s104] ss:$16 sm:$0xc] %vm101, %v100
    %v106 = vld [vmem:[#allocation0] sm:$0xf]
    %107 = vrot.lane.b32.xlu0 %v106, 115
    %v108 = vpop.permute.xlu0 %107
    %vm109 = vcmask 7168
    %s110 = scalar_lea.vmem %s1, 13
    %111 = vst.msk [vmem:[%s110] ss:$16 sm:$0x3] %vm109, %v108
    %s112 = scalar_lea.vmem %s1, 13
    %113 = vst.msk [vmem:[%s112] ss:$16 sm:$0xc] %vm109, %v108
    %v114 = vld [vmem:[#allocation0] sm:$0xf]
    %115 = vrot.lane.b32.xlu0 %v114, 114
    %v116 = vpop.permute.xlu0 %115
    %vm117 = vcmask 7168
    %s118 = scalar_lea.vmem %s1, 14
    %119 = vst.msk [vmem:[%s118] ss:$16 sm:$0x3] %vm117, %v116
    %s120 = scalar_lea.vmem %s1, 14
    %121 = vst.msk [vmem:[%s120] ss:$16 sm:$0xc] %vm117, %v116
    %v122 = vld [vmem:[#allocation0] sm:$0xf]
    %123 = vrot.lane.b32.xlu0 %v122, 113
    %v124 = vpop.permute.xlu0 %123
    %vm125 = vcmask 7168
    %s126 = scalar_lea.vmem %s1, 15
    %127 = vst.msk [vmem:[%s126] ss:$16 sm:$0x3] %vm125, %v124
    %s128 = scalar_lea.vmem %s1, 15
    %129 = vst.msk [vmem:[%s128] ss:$16 sm:$0xc] %vm125, %v124

// kernel: cnn_forward.1
$region0: #{cnn_forward.1}
  #allocation0 [shape = 'u32[]', space=smem, size = 0x4, offset = 0x4, fixed_abs, tag = 'smem constant byte address 0x4 - core index']
  #allocation1 [shape = 'u32[144,128]{1,0:T(1,128)}', space=vmem, size = 0x12000, scoped, tag = 'internal scratch']
  %s0 = inlined_call_operand.vmem [shape: f32[16,128], index: 0, kind: input, shape index: {}]
  %s1 = inlined_call_operand.vmem [shape: f32[256,16], index: 1, kind: input, shape index: {}]
  %s2 = inlined_call_operand.vmem [shape: f32[64,1], index: 2, kind: input, shape index: {}]
  %s3 = inlined_call_operand.vmem [shape: f32[6,64], index: 3, kind: input, shape index: {}]
  %s4 = inlined_call_operand.vmem [shape: f32[6,1], index: 4, kind: input, shape index: {}]
  %s5 = inlined_call_operand.vmem [shape: f32[6,128], index: 5, kind: output, shape index: {}]
  %s6 = sld [smem:[#allocation0]]
  $region30: #{cnn_forward.1} parent=0
    _
  %s8 = ssub.s32 1, %s6
  %s9 = scalar_select 0, %s8, %s6
  // Predicated region
  $region2: #{cnn_forward.1} parent=0 // pred_check
    _
  $region3: #{cnn_forward.1} parent=0 // pred_check_branch
    %11 = sbr.rel (0) target = $region5
  $region4: #{cnn_forward.1} parent=0 // pred_region
    _
  $region5: #{cnn_forward.1} parent=0 // pred_fallthru
    _
  // Predicated region
  $region6: #{cnn_forward.1} parent=0 // pred_check
    _
  $region7: #{cnn_forward.1} parent=0 // pred_check_branch
    %13 = sbr.rel (0) target = $region9
  $region8: #{cnn_forward.1} parent=0 // pred_region
    _
  $region9: #{cnn_forward.1} parent=0 // pred_fallthru
    _
  // Predicated region
  $region10: #{cnn_forward.1} parent=0 // pred_check
    _
  $region11: #{cnn_forward.1} parent=0 // pred_check_branch
    %15 = sbr.rel (0) target = $region13
  $region12: #{cnn_forward.1} parent=0 // pred_region
    _
  $region13: #{cnn_forward.1} parent=0 // pred_fallthru
    _
  // Predicated region
  $region14: #{cnn_forward.1} parent=0 // pred_check
    _
  $region15: #{cnn_forward.1} parent=0 // pred_check_branch
    %17 = sbr.rel (0) target = $region17
  $region16: #{cnn_forward.1} parent=0 // pred_region
    _
  $region17: #{cnn_forward.1} parent=0 // pred_fallthru
    _
  // Predicated region
  $region18: #{cnn_forward.1} parent=0 // pred_check
    _
  $region19: #{cnn_forward.1} parent=0 // pred_check_branch
    %19 = sbr.rel (0) target = $region21
  $region20: #{cnn_forward.1} parent=0 // pred_region
    _
  $region21: #{cnn_forward.1} parent=0 // pred_fallthru
    _
  %v20 = vld [vmem:[%s1] sm:$0xff]
  %v21 = vld [vmem:[%s1 + $0x8] sm:$0xff]
  %v22 = vld [vmem:[%s1 + $0x10] sm:$0xff]
  %v23 = vld [vmem:[%s1 + $0x18] sm:$0xff]
  %v24 = vld [vmem:[%s1 + $0x20] sm:$0xff]
  %v25 = vld [vmem:[%s1 + $0x28] sm:$0xff]
  %v26 = vld [vmem:[%s1 + $0x30] sm:$0xff]
  %v27 = vld [vmem:[%s1 + $0x38] sm:$0xff]
  %v28 = vld [vmem:[%s1 + $0x40] sm:$0xff]
  %v29 = vld [vmem:[%s1 + $0x48] sm:$0xff]
  %v30 = vld [vmem:[%s1 + $0x50] sm:$0xff]
  %v31 = vld [vmem:[%s1 + $0x58] sm:$0xff]
  %v32 = vld [vmem:[%s1 + $0x60] sm:$0xff]
  %v33 = vld [vmem:[%s1 + $0x68] sm:$0xff]
  %v34 = vld [vmem:[%s1 + $0x70] sm:$0xff]
  %v35 = vld [vmem:[%s1 + $0x78] sm:$0xff]
  %v36 = vld [vmem:[%s1 + $0x80] sm:$0xff]
  %v37 = vld [vmem:[%s1 + $0x88] sm:$0xff]
  %v38 = vld [vmem:[%s1 + $0x90] sm:$0xff]
  %v39 = vld [vmem:[%s1 + $0x98] sm:$0xff]
  %v40 = vld [vmem:[%s1 + $0xa0] sm:$0xff]
  %v41 = vld [vmem:[%s1 + $0xa8] sm:$0xff]
  %v42 = vld [vmem:[%s1 + $0xb0] sm:$0xff]
  %v43 = vld [vmem:[%s1 + $0xb8] sm:$0xff]
  %v44 = vld [vmem:[%s1 + $0xc0] sm:$0xff]
  %v45 = vld [vmem:[%s1 + $0xc8] sm:$0xff]
  %v46 = vld [vmem:[%s1 + $0xd0] sm:$0xff]
  %v47 = vld [vmem:[%s1 + $0xd8] sm:$0xff]
  %v48 = vld [vmem:[%s1 + $0xe0] sm:$0xff]
  %v49 = vld [vmem:[%s1 + $0xe8] sm:$0xff]
  %v50 = vld [vmem:[%s1 + $0xf0] sm:$0xff]
  %v51 = vld [vmem:[%s1 + $0xf8] sm:$0xff]
  %v52 = vld [vmem:[%s0] sm:$0xff]
  %v53 = vld [vmem:[%s0 + $0x8] sm:$0xff]
  %vm54 = vcmask 130048
  %v56 = vsel %vm54, %v20, 0
  %v59 = vsel %vm54, %v21, 0
  %v62 = vsel %vm54, %v22, 0
  %v65 = vsel %vm54, %v23, 0
  %v68 = vsel %vm54, %v24, 0
  %v71 = vsel %vm54, %v25, 0
  %v74 = vsel %vm54, %v26, 0
  %v77 = vsel %vm54, %v27, 0
  %v80 = vsel %vm54, %v28, 0
  %v83 = vsel %vm54, %v29, 0
  %v86 = vsel %vm54, %v30, 0
  %v89 = vsel %vm54, %v31, 0
  %v92 = vsel %vm54, %v32, 0
  %v95 = vsel %vm54, %v33, 0
  %v98 = vsel %vm54, %v34, 0
  %v101 = vsel %vm54, %v35, 0
  %v104 = vsel %vm54, %v36, 0
  %v107 = vsel %vm54, %v37, 0
  %v110 = vsel %vm54, %v38, 0
  %v113 = vsel %vm54, %v39, 0
  %v116 = vsel %vm54, %v40, 0
  %v119 = vsel %vm54, %v41, 0
  %v122 = vsel %vm54, %v42, 0
  %v125 = vsel %vm54, %v43, 0
  %v128 = vsel %vm54, %v44, 0
  %v131 = vsel %vm54, %v45, 0
  %v134 = vsel %vm54, %v46, 0
  %v137 = vsel %vm54, %v47, 0
  %v140 = vsel %vm54, %v48, 0
  %v143 = vsel %vm54, %v49, 0
  %v146 = vsel %vm54, %v50, 0
  %v149 = vsel %vm54, %v51, 0
  %151 = vmatprep.subr.mxu0 0.0
  %152 = vmatpush1.msra.mxu0 %v52
  %153 = vmatprep.subr.mxu0 0.0
  %154 = vmatpush1.msra.mxu0 %v53
  %155 = vmatprep.subr.mxu0 0.0
  %156 = vmatpush1.msra.mxu0 0.0
  %157 = vmatprep.subr.mxu0 0.0
  %158 = vmatpush1.msra.mxu0 0.0
  %159 = vmatprep.subr.mxu0 0.0
  %160 = vmatpush1.msra.mxu0 0.0
  %161 = vmatprep.subr.mxu0 0.0
  %162 = vmatpush1.msra.mxu0 0.0
  %163 = vmatprep.subr.mxu0 0.0
  %164 = vmatpush1.msra.mxu0 0.0
  %165 = vmatprep.subr.mxu0 0.0
  %166 = vmatpush1.msra.mxu0 0.0
  %167 = vmatprep.subr.mxu0 0.0
  %168 = vmatpush1.msra.mxu0 0.0
  %169 = vmatprep.subr.mxu0 0.0
  %170 = vmatpush1.msra.mxu0 0.0
  %171 = vmatprep.subr.mxu0 0.0
  %172 = vmatpush1.msra.mxu0 0.0
  %173 = vmatprep.subr.mxu0 0.0
  %174 = vmatpush1.msra.mxu0 0.0
  %175 = vmatprep.subr.mxu0 0.0
  %176 = vmatpush1.msra.mxu0 0.0
  %177 = vmatprep.subr.mxu0 0.0
  %178 = vmatpush1.msra.mxu0 0.0
  %179 = vmatprep.subr.mxu0 0.0
  %180 = vmatpush1.msra.mxu0 0.0
  %181 = vmatprep.subr.mxu0 0.0
  %182 = vmatpush1.msra.mxu0 0.0
  %183 = vmatprep.subr.mxu0 0.0
  %184 = vmatpush1.msra.mxu0 0.0
  %185 = vmatprep.subr.mxu0 0.0
  %186 = vmatpush1.msra.mxu0 0.0
  %187 = vmatprep.subr.mxu0 0.0
  %188 = vmatpush1.msra.mxu0 0.0
  %189 = vmatprep.subr.mxu0 0.0
  %190 = vmatpush1.msra.mxu0 0.0
  %191 = vmatprep.subr.mxu0 0.0
  %192 = vmatpush1.msra.mxu0 0.0
  %193 = vmatprep.subr.mxu0 0.0
  %194 = vmatpush1.msra.mxu0 0.0
  %195 = vmatprep.subr.mxu0 0.0
  %196 = vmatpush1.msra.mxu0 0.0
  %197 = vmatprep.subr.mxu0 0.0
  %198 = vmatpush1.msra.mxu0 0.0
  %199 = vmatprep.subr.mxu0 0.0
  %200 = vmatpush1.msra.mxu0 0.0
  %201 = vmatprep.subr.mxu0 0.0
  %202 = vmatpush1.msra.mxu0 0.0
  %203 = vmatprep.subr.mxu0 0.0
  %204 = vmatpush1.msra.mxu0 0.0
  %205 = vmatprep.subr.mxu0 0.0
  %206 = vmatpush1.msra.mxu0 0.0
  %207 = vmatprep.subr.mxu0 0.0
  %208 = vmatpush1.msra.mxu0 0.0
  %209 = vmatprep.subr.mxu0 0.0
  %210 = vmatpush1.msra.mxu0 0.0
  %211 = vmatprep.subr.mxu0 0.0
  %212 = vmatpush1.msra.mxu0 0.0
  %213 = vmatprep.subr.mxu0 0.0
  %214 = vmatpush1.msra.mxu0 0.0
  %215 = vmatprep.mubr.f32.mxu0 0.0
  %216 = vmatmul.mubr.f32.gmra.mrb[0].mxu0 %v56
  %v217 = vpop.f32.mrb[0].mxu0
  %v218 = vadd.f32 0.0, %v217
  %v219 = vpop.f32.mrb[0].mxu0
  %220 = vmatprep.mubr.f32.mxu0 0.0
  %221 = vmatmul.mubr.f32.gmra.mrb[0].mxu0 %v59
  %v222 = vpop.f32.mrb[0].mxu0
  %v223 = vadd.f32 0.0, %v222
  %v224 = vpop.f32.mrb[0].mxu0
  %225 = vmatprep.mubr.f32.mxu0 0.0
  %226 = vmatmul.mubr.f32.gmra.mrb[0].mxu0 %v62
  %v227 = vpop.f32.mrb[0].mxu0
  %v228 = vadd.f32 0.0, %v227
  %v229 = vpop.f32.mrb[0].mxu0
  %230 = vmatprep.mubr.f32.mxu0 0.0
  %231 = vmatmul.mubr.f32.gmra.mrb[0].mxu0 %v65
  %v232 = vpop.f32.mrb[0].mxu0
  %v233 = vadd.f32 0.0, %v232
  %v234 = vpop.f32.mrb[0].mxu0
  %235 = vmatprep.mubr.f32.mxu0 0.0
  %236 = vmatmul.mubr.f32.gmra.mrb[0].mxu0 %v68
  %v237 = vpop.f32.mrb[0].mxu0
  %v238 = vadd.f32 0.0, %v237
  %v239 = vpop.f32.mrb[0].mxu0
  %240 = vmatprep.mubr.f32.mxu0 0.0
  %241 = vmatmul.mubr.f32.gmra.mrb[0].mxu0 %v71
  %v242 = vpop.f32.mrb[0].mxu0
  %v243 = vadd.f32 0.0, %v242
  %v244 = vpop.f32.mrb[0].mxu0
  %245 = vmatprep.mubr.f32.mxu0 0.0
  %246 = vmatmul.mubr.f32.gmra.mrb[0].mxu0 %v74
  %v247 = vpop.f32.mrb[0].mxu0
  %v248 = vadd.f32 0.0, %v247
  %v249 = vpop.f32.mrb[0].mxu0
  %250 = vmatprep.mubr.f32.mxu0 0.0
  %251 = vmatmul.mubr.f32.gmra.mrb[0].mxu0 %v77
  %v252 = vpop.f32.mrb[0].mxu0
  %v253 = vadd.f32 0.0, %v252
  %v254 = vpop.f32.mrb[0].mxu0
  %255 = vmatprep.mubr.f32.mxu0 0.0
  %256 = vmatmul.mubr.f32.gmra.mrb[0].mxu0 %v80
  %v257 = vpop.f32.mrb[0].mxu0
  %v258 = vadd.f32 0.0, %v257
  %v259 = vpop.f32.mrb[0].mxu0
  %260 = vmatprep.mubr.f32.mxu0 0.0
  %261 = vmatmul.mubr.f32.gmra.mrb[0].mxu0 %v83
  %v262 = vpop.f32.mrb[0].mxu0
  %v263 = vadd.f32 0.0, %v262
  %v264 = vpop.f32.mrb[0].mxu0
  %265 = vmatprep.mubr.f32.mxu0 0.0
  %266 = vmatmul.mubr.f32.gmra.mrb[0].mxu0 %v86
  %v267 = vpop.f32.mrb[0].mxu0
  %v268 = vadd.f32 0.0, %v267
  %v269 = vpop.f32.mrb[0].mxu0
  %270 = vmatprep.mubr.f32.mxu0 0.0
  %271 = vmatmul.mubr.f32.gmra.mrb[0].mxu0 %v89
  %v272 = vpop.f32.mrb[0].mxu0
  %v273 = vadd.f32 0.0, %v272
  %v274 = vpop.f32.mrb[0].mxu0
  %275 = vmatprep.mubr.f32.mxu0 0.0
  %276 = vmatmul.mubr.f32.gmra.mrb[0].mxu0 %v92
  %v277 = vpop.f32.mrb[0].mxu0
  %v278 = vadd.f32 0.0, %v277
  %v279 = vpop.f32.mrb[0].mxu0
  %280 = vmatprep.mubr.f32.mxu0 0.0
  %281 = vmatmul.mubr.f32.gmra.mrb[0].mxu0 %v95
  %v282 = vpop.f32.mrb[0].mxu0
  %v283 = vadd.f32 0.0, %v282
  %v284 = vpop.f32.mrb[0].mxu0
  %285 = vmatprep.mubr.f32.mxu0 0.0
  %286 = vmatmul.mubr.f32.gmra.mrb[0].mxu0 %v98
  %v287 = vpop.f32.mrb[0].mxu0
  %v288 = vadd.f32 0.0, %v287
  %v289 = vpop.f32.mrb[0].mxu0
  %290 = vmatprep.mubr.f32.mxu0 0.0
  %291 = vmatmul.mubr.f32.gmra.mrb[0].mxu0 %v101
  %v292 = vpop.f32.mrb[0].mxu0
  %v293 = vadd.f32 0.0, %v292
  %v294 = vpop.f32.mrb[0].mxu0
  %295 = vmatprep.mubr.f32.mxu0 0.0
  %296 = vmatmul.mubr.f32.gmra.mrb[0].mxu0 %v104
  %v297 = vpop.f32.mrb[0].mxu0
  %v298 = vadd.f32 0.0, %v297
  %v299 = vpop.f32.mrb[0].mxu0
  %300 = vmatprep.mubr.f32.mxu0 0.0
  %301 = vmatmul.mubr.f32.gmra.mrb[0].mxu0 %v107
  %v302 = vpop.f32.mrb[0].mxu0
  %v303 = vadd.f32 0.0, %v302
  %v304 = vpop.f32.mrb[0].mxu0
  %305 = vmatprep.mubr.f32.mxu0 0.0
  %306 = vmatmul.mubr.f32.gmra.mrb[0].mxu0 %v110
  %v307 = vpop.f32.mrb[0].mxu0
  %v308 = vadd.f32 0.0, %v307
  %v309 = vpop.f32.mrb[0].mxu0
  %310 = vmatprep.mubr.f32.mxu0 0.0
  %311 = vmatmul.mubr.f32.gmra.mrb[0].mxu0 %v113
  %v312 = vpop.f32.mrb[0].mxu0
  %v313 = vadd.f32 0.0, %v312
  %v314 = vpop.f32.mrb[0].mxu0
  %315 = vmatprep.mubr.f32.mxu0 0.0
  %316 = vmatmul.mubr.f32.gmra.mrb[0].mxu0 %v116
  %v317 = vpop.f32.mrb[0].mxu0
  %v318 = vadd.f32 0.0, %v317
  %v319 = vpop.f32.mrb[0].mxu0
  %320 = vmatprep.mubr.f32.mxu0 0.0
  %321 = vmatmul.mubr.f32.gmra.mrb[0].mxu0 %v119
  %v322 = vpop.f32.mrb[0].mxu0
  %v323 = vadd.f32 0.0, %v322
  %v324 = vpop.f32.mrb[0].mxu0
  %325 = vmatprep.mubr.f32.mxu0 0.0
  %326 = vmatmul.mubr.f32.gmra.mrb[0].mxu0 %v122
  %v327 = vpop.f32.mrb[0].mxu0
  %v328 = vadd.f32 0.0, %v327
  %v329 = vpop.f32.mrb[0].mxu0
  %330 = vmatprep.mubr.f32.mxu0 0.0
  %331 = vmatmul.mubr.f32.gmra.mrb[0].mxu0 %v125
  %v332 = vpop.f32.mrb[0].mxu0
  %v333 = vadd.f32 0.0, %v332
  %v334 = vpop.f32.mrb[0].mxu0
  %335 = vmatprep.mubr.f32.mxu0 0.0
  %336 = vmatmul.mubr.f32.gmra.mrb[0].mxu0 %v128
  %v337 = vpop.f32.mrb[0].mxu0
  %v338 = vadd.f32 0.0, %v337
  %v339 = vpop.f32.mrb[0].mxu0
  %340 = vmatprep.mubr.f32.mxu0 0.0
  %341 = vmatmul.mubr.f32.gmra.mrb[0].mxu0 %v131
  %v342 = vpop.f32.mrb[0].mxu0
  %v343 = vadd.f32 0.0, %v342
  %v344 = vpop.f32.mrb[0].mxu0
  %345 = vmatprep.mubr.f32.mxu0 0.0
  %346 = vmatmul.mubr.f32.gmra.mrb[0].mxu0 %v134
  %v347 = vpop.f32.mrb[0].mxu0
  %v348 = vadd.f32 0.0, %v347
  %v349 = vpop.f32.mrb[0].mxu0
  %350 = vmatprep.mubr.f32.mxu0 0.0
  %351 = vmatmul.mubr.f32.gmra.mrb[0].mxu0 %v137
  %v352 = vpop.f32.mrb[0].mxu0
  %v353 = vadd.f32 0.0, %v352
  %v354 = vpop.f32.mrb[0].mxu0
  %355 = vmatprep.mubr.f32.mxu0 0.0
  %356 = vmatmul.mubr.f32.gmra.mrb[0].mxu0 %v140
  %v357 = vpop.f32.mrb[0].mxu0
  %v358 = vadd.f32 0.0, %v357
  %v359 = vpop.f32.mrb[0].mxu0
  %360 = vmatprep.mubr.f32.mxu0 0.0
  %361 = vmatmul.mubr.f32.gmra.mrb[0].mxu0 %v143
  %v362 = vpop.f32.mrb[0].mxu0
  %v363 = vadd.f32 0.0, %v362
  %v364 = vpop.f32.mrb[0].mxu0
  %365 = vmatprep.mubr.f32.mxu0 0.0
  %366 = vmatmul.mubr.f32.gmra.mrb[0].mxu0 %v146
  %v367 = vpop.f32.mrb[0].mxu0
  %v368 = vadd.f32 0.0, %v367
  %v369 = vpop.f32.mrb[0].mxu0
  %370 = vmatprep.mubr.f32.mxu0 0.0
  %371 = vmatmul.mubr.f32.gmra.mrb[0].mxu0 %v149
  %v372 = vpop.f32.mrb[0].mxu0
  %v373 = vadd.f32 0.0, %v372
  %v374 = vpop.f32.mrb[0].mxu0
  %375 = vdwg.mxu0
  %v376 = vmax.f32 %v218, %v258
  %v377 = vmax.f32 %v223, %v263
  %v378 = vmax.f32 %v228, %v268
  %v379 = vmax.f32 %v233, %v273
  %v380 = vmax.f32 %v238, %v278
  %v381 = vmax.f32 %v243, %v283
  %v382 = vmax.f32 %v248, %v288
  %v383 = vmax.f32 %v253, %v293
  %v384 = vmax.f32 %v298, %v338
  %v385 = vmax.f32 %v303, %v343
  %v386 = vmax.f32 %v308, %v348
  %v387 = vmax.f32 %v313, %v353
  %v388 = vmax.f32 %v318, %v358
  %v389 = vmax.f32 %v323, %v363
  %v390 = vmax.f32 %v328, %v368
  %v391 = vmax.f32 %v333, %v373
  %v392 = vmax.f32 %v376, %v384
  %v393 = vmax.f32 %v377, %v385
  %v394 = vmax.f32 %v378, %v386
  %v395 = vmax.f32 %v379, %v387
  %v396 = vmax.f32 %v380, %v388
  %v397 = vmax.f32 %v381, %v389
  %v398 = vmax.f32 %v382, %v390
  %v399 = vmax.f32 %v383, %v391
  %v400 = vld [vmem:[%s2] sm:$0xff]
  %v401 = vld [vmem:[%s2 + $0x8] sm:$0xff]
  %v402 = vld [vmem:[%s2 + $0x10] sm:$0xff]
  %v403 = vld [vmem:[%s2 + $0x18] sm:$0xff]
  %v404 = vld [vmem:[%s2 + $0x20] sm:$0xff]
  %v405 = vld [vmem:[%s2 + $0x28] sm:$0xff]
  %v406 = vld [vmem:[%s2 + $0x30] sm:$0xff]
  %v407 = vld [vmem:[%s2 + $0x38] sm:$0xff]
  %409 = vset.pattern.permute.xlu0 0
  %410 = vperm.xlu0 %409, %v400
  %v411 = vpop.permute.xlu0 %410
  %414 = vset.pattern.permute.xlu0 0
  %415 = vperm.xlu0 %414, %v401
  %v416 = vpop.permute.xlu0 %415
  %419 = vset.pattern.permute.xlu0 0
  %420 = vperm.xlu0 %419, %v402
  %v421 = vpop.permute.xlu0 %420
  %424 = vset.pattern.permute.xlu0 0
  %425 = vperm.xlu0 %424, %v403
  %v426 = vpop.permute.xlu0 %425
  %429 = vset.pattern.permute.xlu0 0
  %430 = vperm.xlu0 %429, %v404
  %v431 = vpop.permute.xlu0 %430
  %434 = vset.pattern.permute.xlu0 0
  %435 = vperm.xlu0 %434, %v405
  %v436 = vpop.permute.xlu0 %435
  %439 = vset.pattern.permute.xlu0 0
  %440 = vperm.xlu0 %439, %v406
  %v441 = vpop.permute.xlu0 %440
  %444 = vset.pattern.permute.xlu0 0
  %445 = vperm.xlu0 %444, %v407
  %v446 = vpop.permute.xlu0 %445
  %v448 = vadd.f32 %v392, %v411
  %v449 = vadd.f32 %v393, %v416
  %v450 = vadd.f32 %v394, %v421
  %v451 = vadd.f32 %v395, %v426
  %v452 = vadd.f32 %v396, %v431
  %v453 = vadd.f32 %v397, %v436
  %v454 = vadd.f32 %v398, %v441
  %v455 = vadd.f32 %v399, %v446
  %v456 = vmax.f32 %v448, 0.0
  %v457 = vmax.f32 %v449, 0.0
  %v458 = vmax.f32 %v450, 0.0
  %v459 = vmax.f32 %v451, 0.0
  %v460 = vmax.f32 %v452, 0.0
  %v461 = vmax.f32 %v453, 0.0
  %v462 = vmax.f32 %v454, 0.0
  %v463 = vmax.f32 %v455, 0.0
  %v464 = vld [vmem:[%s3] sm:$0x3f]
  %v465 = vld [vmem:[%s4] sm:$0x3f]
  %467 = vset.pattern.permute.xlu0 0
  %468 = vperm.xlu0 %467, %v465
  %v469 = vpop.permute.xlu0 %468
  %vm471 = vcmask 523264
  %v473 = vsel %vm471, %v464, 0
  %475 = vmatprep.subr.mxu0 0.0
  %476 = vmatpush1.msra.mxu0 %v456
  %477 = vmatprep.subr.mxu0 0.0
  %478 = vmatpush1.msra.mxu0 %v457
  %479 = vmatprep.subr.mxu0 0.0
  %480 = vmatpush1.msra.mxu0 %v458
  %481 = vmatprep.subr.mxu0 0.0
  %482 = vmatpush1.msra.mxu0 %v459
  %483 = vmatprep.subr.mxu0 0.0
  %484 = vmatpush1.msra.mxu0 %v460
  %485 = vmatprep.subr.mxu0 0.0
  %486 = vmatpush1.msra.mxu0 %v461
  %487 = vmatprep.subr.mxu0 0.0
  %488 = vmatpush1.msra.mxu0 %v462
  %489 = vmatprep.subr.mxu0 0.0
  %490 = vmatpush1.msra.mxu0 %v463
  %491 = vmatprep.subr.mxu0 0.0
  %492 = vmatpush1.msra.mxu0 0.0
  %493 = vmatprep.subr.mxu0 0.0
  %494 = vmatpush1.msra.mxu0 0.0
  %495 = vmatprep.subr.mxu0 0.0
  %496 = vmatpush1.msra.mxu0 0.0
  %497 = vmatprep.subr.mxu0 0.0
  %498 = vmatpush1.msra.mxu0 0.0
  %499 = vmatprep.subr.mxu0 0.0
  %500 = vmatpush1.msra.mxu0 0.0
  %501 = vmatprep.subr.mxu0 0.0
  %502 = vmatpush1.msra.mxu0 0.0
  %503 = vmatprep.subr.mxu0 0.0
  %504 = vmatpush1.msra.mxu0 0.0
  %505 = vmatprep.subr.mxu0 0.0
  %506 = vmatpush1.msra.mxu0 0.0
  %507 = vmatprep.subr.mxu0 0.0
  %508 = vmatpush1.msra.mxu0 0.0
  %509 = vmatprep.subr.mxu0 0.0
  %510 = vmatpush1.msra.mxu0 0.0
  %511 = vmatprep.subr.mxu0 0.0
  %512 = vmatpush1.msra.mxu0 0.0
  %513 = vmatprep.subr.mxu0 0.0
  %514 = vmatpush1.msra.mxu0 0.0
  %515 = vmatprep.subr.mxu0 0.0
  %516 = vmatpush1.msra.mxu0 0.0
  %517 = vmatprep.subr.mxu0 0.0
  %518 = vmatpush1.msra.mxu0 0.0
  %519 = vmatprep.subr.mxu0 0.0
  %520 = vmatpush1.msra.mxu0 0.0
  %521 = vmatprep.subr.mxu0 0.0
  %522 = vmatpush1.msra.mxu0 0.0
  %523 = vmatprep.subr.mxu0 0.0
  %524 = vmatpush1.msra.mxu0 0.0
  %525 = vmatprep.subr.mxu0 0.0
  %526 = vmatpush1.msra.mxu0 0.0
  %527 = vmatprep.subr.mxu0 0.0
  %528 = vmatpush1.msra.mxu0 0.0
  %529 = vmatprep.subr.mxu0 0.0
  %530 = vmatpush1.msra.mxu0 0.0
  %531 = vmatprep.subr.mxu0 0.0
  %532 = vmatpush1.msra.mxu0 0.0
  %533 = vmatprep.subr.mxu0 0.0
  %534 = vmatpush1.msra.mxu0 0.0
  %535 = vmatprep.subr.mxu0 0.0
  %536 = vmatpush1.msra.mxu0 0.0
  %537 = vmatprep.subr.mxu0 0.0
  %538 = vmatpush1.msra.mxu0 0.0
  %539 = vmatprep.mubr.f32.mxu0 0.0
  %540 = vmatmul.mubr.f32.gmra.mrb[0].mxu0 %v473
  %v541 = vpop.f32.mrb[0].mxu0
  %v542 = vadd.f32 %v469, %v541
  %v543 = vpop.f32.mrb[0].mxu0
  %544 = vdwg.mxu0
  %545 = vst [vmem:[%s5] sm:$0x3f] %v542
  // Predicated region
  $region22: #{cnn_forward.1} parent=0 // pred_check
    _
  $region23: #{cnn_forward.1} parent=0 // pred_check_branch
    %547 = sbr.rel (0) target = $region25
  $region24: #{cnn_forward.1} parent=0 // pred_region
    _
  $region25: #{cnn_forward.1} parent=0 // pred_fallthru
    _
  // Predicated region
  $region26: #{cnn_forward.1} parent=0 // pred_check
    _
  $region27: #{cnn_forward.1} parent=0 // pred_check_branch
    %549 = sbr.rel (0) target = $region29
  $region28: #{cnn_forward.1} parent=0 // pred_region
    _
  $region29: #{cnn_forward.1} parent=0 // pred_fallthru
    _

</llo_original>
